<compile_context>
chip_gen: v5e
topology: v5e:2x2
jax: 0.10.0
libtpu: 0.0.40
codegen_flags: <defaults>
</compile_context>

<pallas_src>
import jax
import jax.numpy as jnp
from jax.experimental import pallas as pl
from jax.experimental.pallas import tpu as pltpu

_MAX_ROW_TILE = 512  # >=512 rows ~ 85% of HBM roofline on v6e; tiny VMEM cost here.


def _unpool_kernel(inv_ref, x_ref, o_ref):
    """Gather rows of X into one output row tile.

    inv_ref : SMEM int32[N_pad]  (scalar prefetch) inverse index, -1 => zero row
    x_ref   : VMEM [k, F] f32    pooled features, resident across the grid
    o_ref   : VMEM [tm, F] f32   output row tile
    """
    tm = o_ref.shape[0]
    base = pl.program_id(0) * tm

    def body(r, carry):
        src = inv_ref[base + r]                              # scalar from SMEM
        safe = jnp.maximum(src, 0)                           # clamp sentinel -1 in-bounds
        row = x_ref[pl.ds(safe, 1), :].astype(jnp.float32)   # [1, F] gathered row
        keep = (src >= 0).astype(jnp.float32)                # 0.0 for rows not in idx
        o_ref[pl.ds(r, 1), :] = row * keep                   # exact zeros elsewhere
        return carry

    jax.lax.fori_loop(0, tm, body, 0)
    # TODO(synk): replace the per-row loop with a vectorized in-VMEM gather
    # (jnp.take / tpu dynamic_gather) once its Mosaic lowering constraints are
    # pinned down; the loop already has no MXU work and O(N*F) data movement.


def graph_unpool(A, X, idx):
    """Pallas GraphUnpool: returns (A, new_X) with new_X[idx] = X, zeros elsewhere."""
    N = A.shape[0]
    if X.dtype != jnp.float32:
        # TODO(synk): keep sub-32-bit X native and gather packed rows in-kernel
        # (packed-sublane dynamic indexing); for now only f32 skips this pass.
        X = X.astype(jnp.float32)
    k, F = X.shape

    tm = N if N <= _MAX_ROW_TILE else _MAX_ROW_TILE
    num_tiles = -(-N // tm)
    n_pad = num_tiles * tm

    # Inverse index: inv[n] = j if idx[j] == n else -1 (pad rows stay -1).
    # Tiny O(N + k) op; duplicate idx keep one winner (PyTorch: last write wins),
    # out-of-range idx entries are silently dropped.
    inv = jnp.full((n_pad,), -1, dtype=jnp.int32)
    inv = inv.at[idx.astype(jnp.int32)].set(jnp.arange(k, dtype=jnp.int32))

    new_X = pl.pallas_call(
        _unpool_kernel,
        out_shape=jax.ShapeDtypeStruct((N, F), jnp.float32),
        grid_spec=pltpu.PrefetchScalarGridSpec(
            num_scalar_prefetch=1,                  # inv -> SMEM
            grid=(num_tiles,),
            in_specs=[
                # X resident in VMEM across the whole grid.
                # TODO(synk): tile / DMA-stream X if k*F ever exceeds VMEM.
                pl.BlockSpec((k, F), lambda i, inv_smem: (0, 0)),
            ],
            out_specs=pl.BlockSpec((tm, F), lambda i, inv_smem: (i, 0)),
        ),
        compiler_params=pltpu.CompilerParams(
            dimension_semantics=("parallel",),      # shard row tiles across TCs (v7x)
            vmem_limit_bytes=32 * 1024 * 1024,      # explicit; v5e default is 16 MiB
        ),
    )(inv, X)

    # A is a pure passthrough in the reference module; running it through a
    # kernel would only add a pointless HBM round trip.
    return A, new_X


def _reference(A, X, idx):
    return jnp.zeros((A.shape[0], X.shape[1]), jnp.float32).at[idx].set(
        X.astype(jnp.float32))


if __name__ == "__main__":
    # --- Case 1: the module's toy shape (single tile) ---
    N, K, F = 16, 8, 32
    k_a, k_x, k_i = jax.random.split(jax.random.PRNGKey(0), 3)
    A = (jax.random.uniform(k_a, (N, N)) > 0.5).astype(jnp.float32)
    X = jax.random.normal(k_x, (K, F), dtype=jnp.float32)
    idx = jax.random.permutation(k_i, N)[:K].astype(jnp.int32)

    A_out, new_X = graph_unpool(A, X, idx)
    new_X = jax.block_until_ready(new_X)
    ref1 = _reference(A, X, idx)
    assert A_out.shape == (N, N) and jnp.array_equal(A_out, A)
    assert new_X.shape == (N, F) and new_X.dtype == jnp.float32
    assert jnp.allclose(new_X, ref1, atol=1e-6, rtol=1e-6), (
        f"max abs diff = {jnp.max(jnp.abs(new_X - ref1))}")

    # --- Case 2: tiled path (3 row tiles, partial last tile, bf16 features) ---
    N2, K2, F2 = 1400, 640, 128
    k_x2, k_i2 = jax.random.split(jax.random.PRNGKey(1), 2)
    A2 = jnp.eye(N2, dtype=jnp.float32)
    X2 = jax.random.normal(k_x2, (K2, F2), dtype=jnp.float32).astype(jnp.bfloat16)
    idx2 = jax.random.permutation(k_i2, N2)[:K2].astype(jnp.int32)

    _, new_X2 = graph_unpool(A2, X2, idx2)
    new_X2 = jax.block_until_ready(new_X2)
    ref2 = _reference(A2, X2, idx2)
    assert new_X2.shape == (N2, F2)
    assert jnp.allclose(new_X2, ref2, atol=1e-6, rtol=1e-6), (
        f"max abs diff = {jnp.max(jnp.abs(new_X2 - ref2))}")

    print("KERNEL_OK")
</pallas_src>

<mosaic_0001>
module attributes {stable_mosaic.version = 11 : i64} {
  func.func @_unpool_kernel(%arg0: i32, %arg1: memref<16xi32, #tpu.memory_space<smem>>, %arg2: memref<8x32xf32, #tpu.memory_space<vmem>>, %arg3: memref<16x32xf32, #tpu.memory_space<vmem>>) attributes {dimension_semantics = [#tpu.dimension_semantics<parallel>], iteration_bounds = array<i64: 1>, scalar_prefetch = 1 : i64, scratch_operands = 0 : i64, tpu.core_type = #tpu.core_type<tc>, window_params = [{pipeline_mode = #tpu.pipeline_mode<synchronous>, transform_indices = @transform_0, window_bounds = array<i64: 8, 32>}, {transform_indices = @transform_1, window_bounds = array<i64: 16, 32>}]} {
    %c16_i32 = arith.constant 16 : i32
    %0 = arith.muli %arg0, %c16_i32 : i32
    %c0_i32 = arith.constant 0 : i32
    %c16_i32_0 = arith.constant 16 : i32
    %1 = arith.addi %c0_i32, %c16_i32_0 : i32
    %c1_i32 = arith.constant 1 : i32
    scf.for %arg4 = %c0_i32 to %1 step %c1_i32  : i32 {
      %2 = arith.addi %0, %arg4 : i32
      %3 = arith.index_cast %2 : i32 to index
      %4 = memref.load %arg1[%3] : memref<16xi32, #tpu.memory_space<smem>>
      %c0_i32_2 = arith.constant 0 : i32
      %5 = arith.maxsi %4, %c0_i32_2 : i32
      %6 = arith.index_cast %5 : i32 to index
      %c0 = arith.constant 0 : index
      %7 = vector.load %arg2[%6, %c0] : memref<8x32xf32, #tpu.memory_space<vmem>>, vector<1x32xf32>
      %c0_i32_3 = arith.constant 0 : i32
      %8 = arith.cmpi sge, %4, %c0_i32_3 : i32
      %9 = arith.extui %8 : i1 to i32
      %10 = arith.sitofp %9 : i32 to f32
      %11 = vector.broadcast %10 : f32 to vector<1x32xf32>
      %12 = arith.mulf %7, %11 : vector<1x32xf32>
      %13 = arith.index_cast %arg4 : i32 to index
      %c0_4 = arith.constant 0 : index
      %14 = vector.load %arg3[%13, %c0_4] : memref<16x32xf32, #tpu.memory_space<vmem>>, vector<1x32xf32>
      tpu.vector_store %arg3[%13, %c0_4], %12 {strides = array<i32>} : memref<16x32xf32, #tpu.memory_space<vmem>>, vector<1x32xf32>,
    }
    %c16_i32_1 = arith.constant 16 : i32
    return
  }
  func.func @transform_0(%arg0: i32, %arg1: memref<16xi32, #tpu.memory_space<smem>>) -> (i32, i32) {
    %c0_i32 = arith.constant 0 : i32
    %c0_i32_0 = arith.constant 0 : i32
    %c0_i32_1 = arith.constant 0 : i32
    return %c0_i32, %c0_i32_0 : i32, i32
  }
  func.func @transform_1(%arg0: i32, %arg1: memref<16xi32, #tpu.memory_space<smem>>) -> (i32, i32) {
    %c0_i32 = arith.constant 0 : i32
    %c0_i32_0 = arith.constant 0 : i32
    return %arg0, %c0_i32 : i32, i32
  }
}

</mosaic_0001>

<llo_original>
// kernel: tpu_custom_call.1
$region0: #{tpu_custom_call.1}
  #allocation0 [shape = 'u32[]', space=smem, size = 0x4, offset = 0x4, fixed_abs, tag = 'smem constant byte address 0x4 - core index']
  #allocation1 [shape = 'u32[72,128]{1,0:T(1,128)}', space=vmem, size = 0x9000, scoped, tag = 'internal scratch']
  #allocation2 [shape = 's32[1]{0}', space=sflag, size = 0x4, scoped, tag = 'scoped memory for tpu_custom_call.1']
  #allocation3 [shape = 'u8[512]{0}', space=smem, size = 0x200, scoped, tag = 'prefetched SMEM operand 0']
  %s0 = inlined_call_operand.hbm [shape: s32[16], index: 0, kind: input, shape index: {}]
  %s1 = inlined_call_operand.hbm [shape: f32[8,32], index: 1, kind: input, shape index: {}]
  %s2 = inlined_call_operand.hbm [shape: f32[16,32], index: 2, kind: output, shape index: {}]
  %s3 = sld [smem:[#allocation0]]
  $region25: #{tpu_custom_call.1} parent=0
    _
  %s5 = ssub.s32 1, %s3
  %s6 = scalar_select 0, %s5, %s3
  %s8 = sshll.u32 %s0, 4
  %s9 = int_to_ptr.hbm [resolvable:$true] %s8
  %11 = dma.hbm_to_smem %s9, 16, [#allocation3], [#allocation2]
  %13 = dma.done [#allocation2], 16
  %14 = sfence
  $region1: #{tpu_custom_call.1} parent=0
    #allocation4 [shape = 'u8[4096]{0}', space=vmem, size = 0x1000, scoped, tag = 'input window, operand 1, single buffered']
    #allocation5 [shape = 's32[1]{0}', space=sflag, size = 0x4, scoped, tag = 'scoped memory for tpu_custom_call.1']
    #allocation6 [shape = 's32[1]{0}', space=sflag, size = 0x4, scoped, tag = 'scoped memory for tpu_custom_call.1']
    #allocation7 [shape = 'u8[8192]{0}', space=vmem, size = 0x2000, scoped, tag = 'output window, operand 0, single buffered']
    %15 = vsyncpa [#allocation5], 0
    %16 = vsyncpa [#allocation6], 0
    // Predicated region
    $region2: #{tpu_custom_call.1} parent=1 // pred_check
      _
    $region3: #{tpu_custom_call.1} parent=1 // pred_check_branch
      %18 = sbr.rel (0) target = $region5
    $region4: #{tpu_custom_call.1} parent=1 // pred_region
      %20 = vsyncadd [#allocation5], 0
      %s22 = sshll.u32 %s1, 4
      %s23 = int_to_ptr.hbm [resolvable:$true] %s22
      %s24 = sshll.u32 [#allocation4], 4
      %s25 = int_to_ptr.vmem [resolvable:$true] %s24
      %27 = dma.hbm_to_vmem [thread:$0]  %s23, 128, %s25, [#allocation5]
    $region5: #{tpu_custom_call.1} parent=1 // pred_fallthru
      _
    // Predicated region
    $region6: #{tpu_custom_call.1} parent=1 // pred_check
      _
    $region7: #{tpu_custom_call.1} parent=1 // pred_check_branch
      %29 = sbr.rel (0) target = $region9
    $region8: #{tpu_custom_call.1} parent=1 // pred_region
      %31 = dma.done [#allocation5], 128
    $region9: #{tpu_custom_call.1} parent=1 // pred_fallthru
      _
    %s32 = smul.u32 0, 16
    loop: start=0, step=1, limit=16
    $region10: #{tpu_custom_call.1} parent=1 // loop_pre_header
      _
    $region11: #{tpu_custom_call.1} parent=1 // loop_header
      %s34 = sphi 0, %s38
      %p35 = scmp.ge.s32.totalorder %s34, 16
    $region12: #{tpu_custom_call.1} parent=1 // loop_header_branch
      %37 = sbr.rel (%p35) target = $region16
    $region13: #{tpu_custom_call.1} parent=1 // loop_body
      %s39 = sadd.s32 %s32, %s34
      %s40 = sld [smem:[#allocation3 + %s39]]
      %p41 = scmp.gt.s32.totalorder %s40, 0
      %s42 = scalar_select %p41, %s40, 0
      %s43 = scalar_lea.vmem [#allocation4], %s42
      %v44 = vld [vmem:[%s43] sm:$0x1]
      %p45 = scmp.ge.s32.totalorder %s40, 0
      %s46 = scalar_select %p45, 1, 0
      %s47 = scvt.s32.f32 %s46
      %v48 = vstv %s47
      %v49 = vmul.f32 %v44, %v48
      %s50 = scalar_lea.vmem [#allocation7], %s34
      %vm51 = vcmask 253952
      %52 = vst.msk [vmem:[%s50] sm:$0x1] %vm51, %v49
    $region14: #{tpu_custom_call.1} parent=1 // loop_footer
      %s38 = sadd.s32 1, %s34
    $region15: #{tpu_custom_call.1} parent=1 // loop_footer_branch
      %33 = sbr.rel target = $region11
    $region16: #{tpu_custom_call.1} parent=1 // loop_exit
      _
    // Predicated region
    $region17: #{tpu_custom_call.1} parent=1 // pred_check
      _
    $region18: #{tpu_custom_call.1} parent=1 // pred_check_branch
      %54 = sbr.rel (0) target = $region20
    $region19: #{tpu_custom_call.1} parent=1 // pred_region
      %56 = vsyncadd [#allocation6], 0
      %s57 = sshll.u32 [#allocation7], 4
      %s58 = int_to_ptr.vmem [resolvable:$true] %s57
      %s59 = sshll.u32 %s2, 4
      %s60 = int_to_ptr.hbm [resolvable:$true] %s59
      %65 = dma.vmem_to_hbm [thread:$0]  %s58, 256, %s60, [#allocation6], 128, 128, 8
    $region20: #{tpu_custom_call.1} parent=1 // pred_fallthru
      _
    // Predicated region
    $region21: #{tpu_custom_call.1} parent=1 // pred_check
      _
    $region22: #{tpu_custom_call.1} parent=1 // pred_check_branch
      %67 = sbr.rel (0) target = $region24
    $region23: #{tpu_custom_call.1} parent=1 // pred_region
      %69 = dma.done [#allocation6], 256
    $region24: #{tpu_custom_call.1} parent=1 // pred_fallthru
      _
    %70 = vsyncpa [#allocation5], 1
    %71 = vsyncpa [#allocation6], 1

</llo_original>
